<compile_context>
chip_gen: v6e
topology: v6e:2x2x1
jax: 0.10.0
libtpu: 0.0.40
codegen_flags: <defaults>
</compile_context>

<pallas_src>
import functools

import jax
import jax.numpy as jnp
from jax.experimental import pallas as pl
from jax.experimental.pallas import tpu as pltpu


def _round_up(x, m):
    return ((x + m - 1) // m) * m


def _contrastive_kernel(o1_ref, o2_ref, t_ref, loss_ref, *, margin, eps,
                        batch, tb):
    # Upcast in-kernel: free VPU work on a DMA-bound kernel.
    diff = o2_ref[...].astype(jnp.float32) - o1_ref[...].astype(jnp.float32)
    distances = jnp.sum(diff * diff, axis=1, keepdims=True)          # (tb, 1)
    t = t_ref[...]                                                   # (tb, 1)
    hinge = jnp.maximum(margin - jnp.sqrt(distances + eps), 0.0)
    losses = 0.5 * (t * distances + (1.0 - t) * hinge * hinge)

    # The last grid step may cover a partial block; its out-of-bounds rows hold
    # unspecified data, so zero them before writeback (Pallas also drops the
    # OOB rows of the output block, this is belt-and-suspenders).
    row = jax.lax.broadcasted_iota(jnp.int32, (tb, 1), 0)
    valid = (pl.program_id(0) * tb + row) < batch
    loss_ref[...] = jnp.where(valid, losses, 0.0)


def contrastive_loss(output1, output2, target, *, margin, eps=1e-9,
                     size_average=True, tile_rows=None):
    """output1, output2: (B, D); target: (B,) in {0,1}. Returns scalar f32."""
    B, D = output1.shape
    itemsize = jnp.dtype(output1.dtype).itemsize

    # Sublane granularity for packed dtypes: f32 -> 8, bf16 -> 16, fp8 -> 32.
    sub = max(8, 32 // max(itemsize, 1))

    # Generation-aware VMEM budget (v5e/v6e: 128 MiB, v7x: 64 MiB per TC).
    try:
        vmem_phys = int(pltpu.get_tpu_info().vmem_capacity_bytes)
    except Exception:
        vmem_phys = 64 * 1024 * 1024   # conservative (v7x-sized) fallback
    if vmem_phys >= 100 * 1024 * 1024:
        vmem_limit = 80 * 1024 * 1024  # v5e/v6e: well above the 16/32 MiB defaults
    else:
        vmem_limit = 48 * 1024 * 1024  # v7x: leave headroom below 64 MiB
    vmem_limit = min(vmem_limit, int(vmem_phys * 0.85))

    # Bytes per tile row: 2 inputs x 2 pipeline buffers in the input dtype
    # plus ~3 f32 (tb, D) intermediates (upcasts + diff) in the kernel body.
    bytes_per_row = D * (4 * itemsize + 12) + 64
    tb = int(0.75 * vmem_limit) // bytes_per_row
    tb = max(sub, (tb // sub) * sub)
    tb = min(tb, 4096)
    tb = min(tb, _round_up(B, sub))
    if tile_rows is not None:  # explicit override (mainly for testing)
        tb = max(sub, min(tb, (tile_rows // sub) * sub))
    num_tiles = pl.cdiv(B, tb)
    # TODO(synk): for extremely large D (a single `sub`-row tile exceeding the
    # VMEM budget) add a second "arbitrary" grid axis over D with a per-row
    # partial-distance accumulator; not needed at these shapes.

    t = target.astype(jnp.float32).reshape(B, 1)

    kernel = functools.partial(
        _contrastive_kernel, margin=float(margin), eps=float(eps),
        batch=B, tb=tb)

    losses = pl.pallas_call(
        kernel,
        out_shape=jax.ShapeDtypeStruct((B, 1), jnp.float32),
        grid_spec=pltpu.PrefetchScalarGridSpec(
            num_scalar_prefetch=0,
            grid=(num_tiles,),
            in_specs=[
                # Full-D blocks: no wrapper-side padding / copies of the
                # embedding matrices (block dim == full array dim is allowed).
                pl.BlockSpec((tb, D), lambda i: (i, 0)),
                pl.BlockSpec((tb, D), lambda i: (i, 0)),
                pl.BlockSpec((tb, 1), lambda i: (i, 0)),
            ],
            out_specs=pl.BlockSpec((tb, 1), lambda i: (i, 0)),
        ),
        compiler_params=pltpu.CompilerParams(
            # "parallel" lets the batch grid shard across both TensorCores on
            # v7x; on v5e/v6e (1 TC) it is neutral.
            dimension_semantics=("parallel",),
            vmem_limit_bytes=vmem_limit,
        ),
    )(output1, output2, t)

    total = jnp.sum(losses)
    if size_average:
        total = total / jnp.float32(B)
    return total


def _reference(output1, output2, target, margin, eps=1e-9, size_average=True):
    d = jnp.sum((output2.astype(jnp.float32) - output1.astype(jnp.float32)) ** 2,
                axis=1)
    t = target.astype(jnp.float32)
    losses = 0.5 * (t * d
                    + (1.0 - t) * jnp.maximum(margin - jnp.sqrt(d + eps), 0.0) ** 2)
    return jnp.mean(losses) if size_average else jnp.sum(losses)


if __name__ == "__main__":
    key = jax.random.PRNGKey(0)
    k1, k2, k3 = jax.random.split(key, 3)
    margin = 1.0

    # Case 1: small f32 demo (B=8, D=32) -> full-dim (unpadded) lane block.
    B, D = 8, 32
    output1 = jax.random.normal(k1, (B, D), dtype=jnp.float32)
    output2 = jax.random.normal(k2, (B, D), dtype=jnp.float32)
    target = jax.random.bernoulli(k3, 0.5, (B,)).astype(jnp.int32)

    loss = jax.block_until_ready(
        contrastive_loss(output1, output2, target, margin=margin))
    ref = _reference(output1, output2, target, margin)
    assert jnp.allclose(loss, ref, rtol=1e-5, atol=1e-6), (loss, ref)

    loss_sum = jax.block_until_ready(
        contrastive_loss(output1, output2, target, margin=margin,
                         size_average=False))
    ref_sum = _reference(output1, output2, target, margin, size_average=False)
    assert jnp.allclose(loss_sum, ref_sum, rtol=1e-5, atol=1e-6), (loss_sum, ref_sum)

    # Case 2: ragged batch + ragged D + bf16 embeddings -> exercises the
    # partial-block path and in-kernel upcast (no wrapper padding/copies).
    k4, k5, k6 = jax.random.split(k3, 3)
    B2, D2 = 50, 200
    o1b = jax.random.normal(k4, (B2, D2), dtype=jnp.bfloat16)
    o2b = jax.random.normal(k5, (B2, D2), dtype=jnp.bfloat16)
    tb_lbl = jax.random.bernoulli(k6, 0.5, (B2,)).astype(jnp.int32)

    loss_b = jax.block_until_ready(
        contrastive_loss(o1b, o2b, tb_lbl, margin=margin))
    ref_b = _reference(o1b, o2b, tb_lbl, margin)
    assert jnp.allclose(loss_b, ref_b, rtol=1e-3, atol=1e-3), (loss_b, ref_b)

    # Case 3: multi-tile grid with a ragged last tile (forced small tile) ->
    # exercises the in-kernel row mask across several grid steps.
    k7, k8, k9 = jax.random.split(k6, 3)
    B3, D3 = 40, 96
    o1c = jax.random.normal(k7, (B3, D3), dtype=jnp.float32)
    o2c = jax.random.normal(k8, (B3, D3), dtype=jnp.float32)
    tc = jax.random.bernoulli(k9, 0.5, (B3,)).astype(jnp.int32)

    loss_c = jax.block_until_ready(
        contrastive_loss(o1c, o2c, tc, margin=margin, tile_rows=16))
    ref_c = _reference(o1c, o2c, tc, margin)
    assert jnp.allclose(loss_c, ref_c, rtol=1e-5, atol=1e-6), (loss_c, ref_c)

    print("KERNEL_OK")
</pallas_src>

<mosaic_0001>
module attributes {stable_mosaic.version = 11 : i64} {
  func.func @_contrastive_kernel(%arg0: i32, %arg1: memref<8x32xf32, #tpu.memory_space<vmem>>, %arg2: memref<8x32xf32, #tpu.memory_space<vmem>>, %arg3: memref<8x1xf32, #tpu.memory_space<vmem>>, %arg4: memref<8x1xf32, #tpu.memory_space<vmem>>) attributes {dimension_semantics = [#tpu.dimension_semantics<parallel>], iteration_bounds = array<i64: 1>, scalar_prefetch = 0 : i64, scratch_operands = 0 : i64, tpu.core_type = #tpu.core_type<tc>, window_params = [{transform_indices = @transform_0, window_bounds = array<i64: 8, 32>}, {transform_indices = @transform_1, window_bounds = array<i64: 8, 32>}, {transform_indices = @transform_2, window_bounds = array<i64: 8, 1>}, {transform_indices = @transform_3, window_bounds = array<i64: 8, 1>}]} {
    %c0 = arith.constant 0 : index
    %c0_0 = arith.constant 0 : index
    %0 = vector.load %arg2[%c0, %c0_0] : memref<8x32xf32, #tpu.memory_space<vmem>>, vector<8x32xf32>
    %c0_1 = arith.constant 0 : index
    %c0_2 = arith.constant 0 : index
    %1 = vector.load %arg1[%c0_1, %c0_2] : memref<8x32xf32, #tpu.memory_space<vmem>>, vector<8x32xf32>
    %2 = arith.subf %0, %1 : vector<8x32xf32>
    %3 = arith.mulf %2, %2 : vector<8x32xf32>
    %cst = arith.constant dense<0.000000e+00> : vector<8xf32>
    %4 = vector.multi_reduction <add>, %3, %cst [1] : vector<8x32xf32> to vector<8xf32>
    %5 = vector.shape_cast %4 : vector<8xf32> to vector<8x1xf32>
    %c0_3 = arith.constant 0 : index
    %c0_4 = arith.constant 0 : index
    %6 = vector.load %arg3[%c0_3, %c0_4] : memref<8x1xf32, #tpu.memory_space<vmem>>, vector<8x1xf32>
    %cst_5 = arith.constant 9.99999971E-10 : f32
    %7 = vector.broadcast %cst_5 : f32 to vector<8x1xf32>
    %8 = arith.addf %5, %7 : vector<8x1xf32>
    %9 = math.sqrt %8 : vector<8x1xf32>
    %cst_6 = arith.constant 1.000000e+00 : f32
    %10 = vector.broadcast %cst_6 : f32 to vector<8x1xf32>
    %11 = arith.subf %10, %9 : vector<8x1xf32>
    %cst_7 = arith.constant 0.000000e+00 : f32
    %12 = vector.broadcast %cst_7 : f32 to vector<8x1xf32>
    %13 = arith.maximumf %11, %12 : vector<8x1xf32>
    %14 = arith.mulf %6, %5 : vector<8x1xf32>
    %cst_8 = arith.constant 1.000000e+00 : f32
    %15 = vector.broadcast %cst_8 : f32 to vector<8x1xf32>
    %16 = arith.subf %15, %6 : vector<8x1xf32>
    %17 = arith.mulf %16, %13 : vector<8x1xf32>
    %18 = arith.mulf %17, %13 : vector<8x1xf32>
    %19 = arith.addf %14, %18 : vector<8x1xf32>
    %cst_9 = arith.constant 5.000000e-01 : f32
    %20 = vector.broadcast %cst_9 : f32 to vector<8x1xf32>
    %21 = arith.mulf %20, %19 : vector<8x1xf32>
    %22 = tpu.iota {dimensions = array<i32: 0>} : vector<8x1xi32>
    %c8_i32 = arith.constant 8 : i32
    %23 = arith.muli %arg0, %c8_i32 : i32
    %24 = vector.broadcast %23 : i32 to vector<8x1xi32>
    %25 = arith.addi %24, %22 : vector<8x1xi32>
    %c8_i32_10 = arith.constant 8 : i32
    %26 = vector.broadcast %c8_i32_10 : i32 to vector<8x1xi32>
    %27 = arith.cmpi slt, %25, %26 : vector<8x1xi32>
    %cst_11 = arith.constant 0.000000e+00 : f32
    %28 = vector.broadcast %cst_11 : f32 to vector<8x1xf32>
    %29 = arith.select %27, %21, %28 : vector<8x1xi1>, vector<8x1xf32>
    %c0_12 = arith.constant 0 : index
    %c0_13 = arith.constant 0 : index
    %30 = vector.load %arg4[%c0_12, %c0_13] : memref<8x1xf32, #tpu.memory_space<vmem>>, vector<8x1xf32>
    tpu.vector_store %arg4[%c0_12, %c0_13], %29 {strides = array<i32>} : memref<8x1xf32, #tpu.memory_space<vmem>>, vector<8x1xf32>,
    return
  }
  func.func @transform_0(%arg0: i32) -> (i32, i32) {
    %c0_i32 = arith.constant 0 : i32
    %c0_i32_0 = arith.constant 0 : i32
    return %arg0, %c0_i32 : i32, i32
  }
  func.func @transform_1(%arg0: i32) -> (i32, i32) {
    %c0_i32 = arith.constant 0 : i32
    %c0_i32_0 = arith.constant 0 : i32
    return %arg0, %c0_i32 : i32, i32
  }
  func.func @transform_2(%arg0: i32) -> (i32, i32) {
    %c0_i32 = arith.constant 0 : i32
    %c0_i32_0 = arith.constant 0 : i32
    return %arg0, %c0_i32 : i32, i32
  }
  func.func @transform_3(%arg0: i32) -> (i32, i32) {
    %c0_i32 = arith.constant 0 : i32
    %c0_i32_0 = arith.constant 0 : i32
    return %arg0, %c0_i32 : i32, i32
  }
}

</mosaic_0001>

<llo_original>
// kernel: tpu_custom_call.1
$region0: #{tpu_custom_call.1}
  #allocation0 [shape = 'u32[]', space=smem, size = 0x4, offset = 0x4, fixed_abs, tag = 'smem constant byte address 0x4 - core index']
  #allocation1 [shape = 'u32[144,128]{1,0:T(1,128)}', space=vmem, size = 0x12000, scoped, tag = 'internal scratch']
  %s0 = inlined_call_operand.vmem [shape: f32[8,32], index: 0, kind: input, shape index: {}]
  %s1 = inlined_call_operand.hbm [shape: f32[8,32], index: 1, kind: input, shape index: {}]
  %s2 = inlined_call_operand.vmem [shape: f32[8,1], index: 2, kind: input, shape index: {}]
  %s3 = inlined_call_operand.vmem [shape: f32[8,1], index: 3, kind: output, shape index: {}]
  %s4 = sld [smem:[#allocation0]]
  $region26: #{tpu_custom_call.1} parent=0
    _
  %s6 = ssub.s32 1, %s4
  %s7 = scalar_select 0, %s6, %s4
  $region1: #{tpu_custom_call.1} parent=0
    #allocation2 [shape = 'u8[4096]{0}', space=vmem, size = 0x1000, scoped, tag = 'input window, operand 1, single buffered']
    #allocation3 [shape = 's32[1]{0}', space=sflag, size = 0x4, scoped, tag = 'scoped memory for tpu_custom_call.1']
    %8 = vsyncpa [#allocation3], 0
    // Predicated region
    $region2: #{tpu_custom_call.1} parent=1 // pred_check
      _
    $region3: #{tpu_custom_call.1} parent=1 // pred_check_branch
      %10 = sbr.rel (0) target = $region5
    $region4: #{tpu_custom_call.1} parent=1 // pred_region
      _
    $region5: #{tpu_custom_call.1} parent=1 // pred_fallthru
      _
    // Predicated region
    $region6: #{tpu_custom_call.1} parent=1 // pred_check
      _
    $region7: #{tpu_custom_call.1} parent=1 // pred_check_branch
      %12 = sbr.rel (0) target = $region9
    $region8: #{tpu_custom_call.1} parent=1 // pred_region
      %s14 = ssub.s32 128, 128
      %15 = vsyncadd [#allocation3], %s14
      %s17 = sshll.u32 [#allocation2], 4
      %s18 = int_to_ptr.vmem [resolvable:$true] %s17
      %20 = dma.hbm_to_vmem [thread:$0]  %s1, 128, %s18, [#allocation3]
    $region9: #{tpu_custom_call.1} parent=1 // pred_fallthru
      _
    // Predicated region
    $region10: #{tpu_custom_call.1} parent=1 // pred_check
      _
    $region11: #{tpu_custom_call.1} parent=1 // pred_check_branch
      %22 = sbr.rel (0) target = $region13
    $region12: #{tpu_custom_call.1} parent=1 // pred_region
      _
    $region13: #{tpu_custom_call.1} parent=1 // pred_fallthru
      _
    // Predicated region
    $region14: #{tpu_custom_call.1} parent=1 // pred_check
      _
    $region15: #{tpu_custom_call.1} parent=1 // pred_check_branch
      %24 = sbr.rel (0) target = $region17
    $region16: #{tpu_custom_call.1} parent=1 // pred_region
      %25 = dma.done [#allocation3], 128
    $region17: #{tpu_custom_call.1} parent=1 // pred_fallthru
      _
    %v26 = vld [vmem:[#allocation2] sm:$0xff]
    %v27 = vld [vmem:[%s0] sm:$0xff]
    %v28 = vsub.f32 %v26, %v27
    %v29 = vmul.f32 %v28, %v28
    %vm30 = vcmask 261120
    %v31 = vsel %vm30, %v29, 0.0
    %32 = vadd.xlane.f32.xlu0 %v31
    %v33 = vpop.xlane.xlu0 %32
    %v34 = vld [vmem:[%s2] sm:$0xff]
    %v35 = vadd.f32 %v33, 1e-09
    %v36 = vrsqrt.pop %v35
    %v37 = vmul.f32 %v35, %v36
    %vm38 = vcmp.eq.f32.partialorder %v35, inf
    %v39 = vsel %vm38, %v35, %v37
    %vm40 = vcmp.eq.f32.partialorder %v35, 0.0
    %v41 = vand.u32 %v35, 2147483648
    %v42 = vsel %vm40, %v41, %v39
    %v43 = vsub.f32 1.0, %v42
    %v44 = vmax.f32 %v43, 0.0
    %v45 = vmul.f32 %v34, %v33
    %v46 = vsub.f32 1.0, %v34
    %v47 = vmul.f32 %v46, %v44
    %v48 = vmul.f32 %v47, %v44
    %v49 = vadd.f32 %v45, %v48
    %v50 = vmul.f32 %v49, 0.5
    %v51 = vlaneseq
    %v52 = vshrl.u32 %v51, 7
    %s53 = smul.u32 0, 8
    %v54 = vstv %s53
    %v55 = vadd.s32 %v54, %v52
    %vm56 = vcmp.lt.s32.totalorder %v55, 8
    %v57 = vsel %vm56, %v50, 0.0
    %vm58 = vcmask 7168
    %59 = vst.msk [vmem:[%s3] sm:$0xff] %vm58, %v57
    // Predicated region
    $region18: #{tpu_custom_call.1} parent=1 // pred_check
      _
    $region19: #{tpu_custom_call.1} parent=1 // pred_check_branch
      %61 = sbr.rel (0) target = $region21
    $region20: #{tpu_custom_call.1} parent=1 // pred_region
      _
    $region21: #{tpu_custom_call.1} parent=1 // pred_fallthru
      _
    // Predicated region
    $region22: #{tpu_custom_call.1} parent=1 // pred_check
      _
    $region23: #{tpu_custom_call.1} parent=1 // pred_check_branch
      %63 = sbr.rel (0) target = $region25
    $region24: #{tpu_custom_call.1} parent=1 // pred_region
      _
    $region25: #{tpu_custom_call.1} parent=1 // pred_fallthru
      _
    %64 = vsyncpa [#allocation3], 1

</llo_original>
